<compile_context>
chip_gen: v7x
topology: tpu7x:2x2x1
jax: 0.10.0
libtpu: 0.0.40
codegen_flags: <defaults>
</compile_context>

<pallas_src>
import math
import functools

import jax
import jax.numpy as jnp
from jax import lax
from jax.experimental import pallas as pl
from jax.experimental.pallas import tpu as pltpu

# Matmul operand dtype (MXU is bf16-native on v5e/v6e/v7x).  Accumulation & outputs stay f32.
MXU_DTYPE = jnp.bfloat16


def _hw_config():
    """Generation-aware tile caps + scoped-VMEM limit.

    v5e/v6e (128 MiB VMEM): bigger M tiles amortize per-step pipeline overhead.
    v7x (64 MiB physical / 32 MiB scoped): keep the conservative config; its 2 TCs are fed by
    the parallel dimension_semantics instead of bigger tiles.
    """
    try:
        vmem = pltpu.get_tpu_info().vmem_capacity_bytes
    except Exception:
        vmem = 64 * 1024 * 1024
    if vmem >= 128 * 1024 * 1024:            # v5e / v6e
        return 512, 512, 512, 64 * 1024 * 1024
    return 256, 512, 512, 32 * 1024 * 1024   # v7x-class


_TM_CAP, _TN_CAP, _TK_CAP, _VMEM_LIMIT = _hw_config()

# Matmuls that cannot occupy even a sub-tile of the MXU go to XLA (skips host-side padding and
# the ~0.35us/grid-step fixed cost).  Kept tiny here so the toy demo exercises Pallas.
_FALLBACK_MIN_DIM = 8
_FALLBACK_FLOPS = 4096

_ACTS = {
    'relu': jax.nn.relu,
    'tanh': jnp.tanh,
    'lrelu_0.1': lambda v: jax.nn.leaky_relu(v, 0.1),
    'lrelu_0.01': lambda v: jax.nn.leaky_relu(v, 0.01),
}


def _round_up(x, m):
    return ((x + m - 1) // m) * m


def _tile(dim, cap):
    """Pick (tile, padded_dim).  Small dims use a full-extent block (no host-side padding)."""
    if dim <= cap:
        return dim, dim
    return cap, _round_up(dim, cap)


# ----------------------------------------------------------------------------
# Pallas kernels
# ----------------------------------------------------------------------------

def _make_matmul_kernel(has_bias, pre_act, act):
    """Tiled matmul with K-accumulation directly into the resident f32 output block, plus an
    optional fused epilogue (bias add + activation) and pre-activation on the A operand."""

    def _body(a_ref, b_ref, bias_ref, o_ref):
        kstep = pl.program_id(2)

        @pl.when(kstep == 0)
        def _():
            o_ref[...] = jnp.zeros_like(o_ref)

        a = a_ref[...]
        if pre_act is not None:
            a = pre_act(a)                               # f(0)=0 => safe on zero-padded taps
        o_ref[...] += jnp.dot(a, b_ref[...], preferred_element_type=jnp.float32)

        if has_bias or act is not None:
            @pl.when(kstep == pl.num_programs(2) - 1)
            def _():
                r = o_ref[...]
                if has_bias:
                    r = r + bias_ref[...]                # (1, tn) broadcast over rows
                if act is not None:
                    r = act(r)                           # f32 VPU/EUP work hidden under MXU
                o_ref[...] = r

    if has_bias:
        return lambda a_ref, b_ref, bias_ref, o_ref: _body(a_ref, b_ref, bias_ref, o_ref)
    return lambda a_ref, b_ref, o_ref: _body(a_ref, b_ref, None, o_ref)


def pl_matmul(a, b, bias=None, pre_act=None, activation=None):
    """2-D matmul with bf16 operands / f32 accumulation and a fused epilogue."""
    M, K = a.shape
    K2, N = b.shape
    assert K == K2
    pre_fn = _ACTS[pre_act] if pre_act is not None else None
    act_fn = _ACTS[activation] if activation is not None else None

    if min(M, N, K) < _FALLBACK_MIN_DIM or 2 * M * N * K < _FALLBACK_FLOPS:
        aa = pre_fn(a) if pre_fn is not None else a
        y = jnp.dot(aa.astype(jnp.float32), b.astype(jnp.float32))
        if bias is not None:
            y = y + bias[None, :]
        return act_fn(y) if act_fn is not None else y

    a = a.astype(MXU_DTYPE)
    b = b.astype(MXU_DTYPE)
    tm, Mp = _tile(M, _TM_CAP)
    tk, Kp = _tile(K, _TK_CAP)
    tn, Np = _tile(N, _TN_CAP)
    # TODO(synk): callers with M,K over the caps still pay a host-side jnp.pad of the
    #             activation operand; pad once at layout time instead.
    if (Mp, Kp) != (M, K):
        a = jnp.pad(a, ((0, Mp - M), (0, Kp - K)))
    if (Kp, Np) != (K, N):
        b = jnp.pad(b, ((0, Kp - K), (0, Np - N)))

    in_specs = [pl.BlockSpec((tm, tk), lambda i, j, k: (i, k)),
                pl.BlockSpec((tk, tn), lambda i, j, k: (k, j))]
    operands = [a, b]
    if bias is not None:
        bias2 = bias.reshape(1, N).astype(jnp.float32)
        if Np != N:
            bias2 = jnp.pad(bias2, ((0, 0), (0, Np - N)))
        in_specs.append(pl.BlockSpec((1, tn), lambda i, j, k: (0, j)))
        operands.append(bias2)

    out = pl.pallas_call(
        _make_matmul_kernel(bias is not None, pre_fn, act_fn),
        grid=(Mp // tm, Np // tn, Kp // tk),
        in_specs=in_specs,
        out_specs=pl.BlockSpec((tm, tn), lambda i, j, k: (i, j)),
        out_shape=jax.ShapeDtypeStruct((Mp, Np), jnp.float32),
        compiler_params=pltpu.CompilerParams(
            dimension_semantics=("parallel", "parallel", "arbitrary"),
            vmem_limit_bytes=_VMEM_LIMIT),
    )(*operands)
    return out[:M, :N] if (Mp, Np) != (M, N) else out


def _bmm_kernel(a_ref, b_ref, o_ref):
    kstep = pl.program_id(3)

    @pl.when(kstep == 0)
    def _():
        o_ref[...] = jnp.zeros_like(o_ref)

    o_ref[0] = o_ref[0] + jnp.dot(a_ref[0], b_ref[0], preferred_element_type=jnp.float32)


def pl_bmm(a, b, dtype=None):
    """Batched matmul a:(B,M,K) @ b:(B,K,N) in ONE gridded pallas_call (batch grid axis)."""
    B, M, K = a.shape
    B2, K2, N = b.shape
    assert B == B2 and K == K2
    if min(M, N, K) < _FALLBACK_MIN_DIM:
        return jnp.matmul(a.astype(jnp.float32), b.astype(jnp.float32))
    dtype = MXU_DTYPE if dtype is None else dtype
    a = a.astype(dtype)
    b = b.astype(dtype)
    tm, Mp = _tile(M, _TM_CAP)
    tk, Kp = _tile(K, _TK_CAP)
    tn, Np = _tile(N, _TN_CAP)
    if (Mp, Kp) != (M, K):
        a = jnp.pad(a, ((0, 0), (0, Mp - M), (0, Kp - K)))
    if (Kp, Np) != (K, N):
        b = jnp.pad(b, ((0, 0), (0, Kp - K), (0, Np - N)))
    out = pl.pallas_call(
        _bmm_kernel,
        grid=(B, Mp // tm, Np // tn, Kp // tk),
        in_specs=[pl.BlockSpec((1, tm, tk), lambda bi, i, j, k: (bi, i, k)),
                  pl.BlockSpec((1, tk, tn), lambda bi, i, j, k: (bi, k, j))],
        out_specs=pl.BlockSpec((1, tm, tn), lambda bi, i, j, k: (bi, i, j)),
        out_shape=jax.ShapeDtypeStruct((B, Mp, Np), jnp.float32),
        compiler_params=pltpu.CompilerParams(
            dimension_semantics=("parallel", "parallel", "parallel", "arbitrary"),
            vmem_limit_bytes=_VMEM_LIMIT),
    )(a, b)
    return out[:, :M, :N] if (Mp, Np) != (M, N) else out


_GATE_ROWS_CAP = 1024  # (1024,128) f32 block = 512 KiB per operand


def _gate_kernel(a_ref, b_ref, o_ref):
    a = a_ref[...].astype(jnp.float32)
    b = b_ref[...].astype(jnp.float32)
    o_ref[...] = jnp.tanh(a) * jax.nn.sigmoid(b)        # f32 EUP/VPU math


def pl_gate(xa, xb):
    """Fused WaveNet gate tanh(xa)*sigmoid(xb) on (rows, 128) blocks (full 8x128 vregs)."""
    shape = xa.shape
    total = xa.size
    lanes = 128
    rows = _round_up(total, 8 * lanes) // lanes
    pad = rows * lanes - total
    a2 = jnp.pad(xa.reshape(-1).astype(jnp.float32), (0, pad)).reshape(rows, lanes)
    b2 = jnp.pad(xb.reshape(-1).astype(jnp.float32), (0, pad)).reshape(rows, lanes)
    if rows <= _GATE_ROWS_CAP:
        out = pl.pallas_call(
            _gate_kernel,
            out_shape=jax.ShapeDtypeStruct((rows, lanes), jnp.float32),
        )(a2, b2)
    else:
        rows_p = _round_up(rows, _GATE_ROWS_CAP)
        if rows_p != rows:
            a2 = jnp.pad(a2, ((0, rows_p - rows), (0, 0)))
            b2 = jnp.pad(b2, ((0, rows_p - rows), (0, 0)))
        spec = pl.BlockSpec((_GATE_ROWS_CAP, lanes), lambda i: (i, 0))
        out = pl.pallas_call(
            _gate_kernel,
            grid=(rows_p // _GATE_ROWS_CAP,),
            in_specs=[spec, spec], out_specs=spec,
            out_shape=jax.ShapeDtypeStruct((rows_p, lanes), jnp.float32),
            compiler_params=pltpu.CompilerParams(dimension_semantics=("parallel",),
                                                 vmem_limit_bytes=_VMEM_LIMIT),
        )(a2, b2)
        out = out[:rows]
    return out.reshape(-1)[:total].reshape(shape)


def _attn_kernel(q_ref, k_ref, v_ref, mrow_ref, mcol_ref, o_ref):
    q = q_ref[0]                     # (H, T, Dh); 1/sqrt(Dh) already folded into the Q weights
    kk = k_ref[0]
    v = v_ref[0]
    mr = mrow_ref[0].astype(jnp.float32)                 # (T, 1)
    mc = mcol_ref[0].astype(jnp.float32)                 # (1, T)
    bias = (1.0 - mr * mc) * -1e4                        # (T, T) built in-kernel (no HBM bias)
    outs = []
    for h in range(q.shape[0]):                          # static unroll over heads
        s = jnp.dot(q[h], kk[h].T, preferred_element_type=jnp.float32) + bias
        s = s - jnp.max(s, axis=-1, keepdims=True)
        p = jnp.exp(s)                                   # f32 softmax
        p = p * pl.reciprocal(jnp.sum(p, axis=-1, keepdims=True), approx=True)
        outs.append(jnp.dot(p.astype(v.dtype), v[h], preferred_element_type=jnp.float32))
    o_ref[0] = jnp.concatenate(outs, axis=-1)            # lane-dense (T, H*Dh) store


def pl_attention(q, k, v, x_mask):
    """q,k,v: (B,H,T,Dh) ; x_mask: (B,1,T).  One grid=(B,) call covers all heads."""
    B, H, T, Dh = q.shape
    spec_qkv = pl.BlockSpec((1, H, T, Dh), lambda b: (b, 0, 0, 0))
    spec_mrow = pl.BlockSpec((1, T, 1), lambda b: (b, 0, 0))
    spec_mcol = pl.BlockSpec((1, 1, T), lambda b: (b, 0, 0))
    spec_out = pl.BlockSpec((1, T, H * Dh), lambda b: (b, 0, 0))
    m_col = x_mask.astype(jnp.float32)                   # (B, 1, T)
    m_row = m_col.transpose(0, 2, 1)                     # (B, T, 1)
    # TODO(synk): for long T / v7x's 32 MiB scoped VMEM, add a query-tile grid axis with an
    #             online softmax instead of the full TxT score block.
    return pl.pallas_call(
        _attn_kernel,
        grid=(B,),
        in_specs=[spec_qkv, spec_qkv, spec_qkv, spec_mrow, spec_mcol],
        out_specs=spec_out,
        out_shape=jax.ShapeDtypeStruct((B, T, H * Dh), jnp.float32),
        compiler_params=pltpu.CompilerParams(dimension_semantics=("parallel",),
                                             vmem_limit_bytes=_VMEM_LIMIT),
    )(q.astype(MXU_DTYPE), k.astype(MXU_DTYPE), v.astype(MXU_DTYPE), m_row, m_col)


# ----------------------------------------------------------------------------
# Conv primitives built on the Pallas matmul (im2col) — weight prep done at init
# ----------------------------------------------------------------------------

def conv1d(x, p, stride=1, padding=0, dilation=1, pre_act=None, activation=None):
    """x: (B, Cin, T).  p['wm'] is the (Cin*K, Cout) matmul weight built once at init.
    pre_act (leaky_relu) and activation/bias run fused inside the matmul kernel."""
    # TODO(synk): keeping activations in (B, T, C) end-to-end would remove the transpose pair
    #             around every conv / attention layer (pure HBM + XLU relayout cost).
    B, Cin, T = x.shape
    K = p['k']
    Cout = p['wm'].shape[1]
    if K == 1 and stride == 1 and dilation == 1 and padding == 0:
        T_out = T
        a = x.transpose(0, 2, 1).reshape(B * T, Cin)
    else:
        # TODO(synk): im2col still materializes the K-tap patch tensor in HBM; folding the tap
        #             axis into the matmul reduction grid (per-tap time offsets via pl.ds /
        #             pl.Element) would remove the K-fold HBM traffic.
        xp = jnp.pad(x, ((0, 0), (0, 0), (padding, padding)))
        Tp = T + 2 * padding
        T_out = (Tp - dilation * (K - 1) - 1) // stride + 1
        cols = []
        for kk in range(K):
            start = kk * dilation
            end = start + (T_out - 1) * stride + 1
            cols.append(xp[:, :, start:end:stride])
        patches = jnp.stack(cols, axis=2).reshape(B, Cin * K, T_out)
        a = patches.transpose(0, 2, 1).reshape(B * T_out, Cin * K)
    y = pl_matmul(a, p['wm'], bias=p.get('b'), pre_act=pre_act, activation=activation)
    return y.reshape(B, T_out, Cout).transpose(0, 2, 1)


def conv_transpose1d(x, p, stride=1, padding=0, pre_act=None):
    """PyTorch ConvTranspose1d; p['wm'] already holds the flipped/transposed weight."""
    # TODO(synk): a polyphase/sub-pixel formulation would avoid the zero-stuffed input and the
    #             (stride-1)/stride wasted MXU flops in the HiFi-GAN upsample stages.
    B, Cin, T = x.shape
    K = p['k']
    xd = jnp.zeros((B, Cin, (T - 1) * stride + 1), x.dtype).at[:, :, ::stride].set(x)
    return conv1d(xd, p, stride=1, padding=K - 1 - padding, pre_act=pre_act)


def depthwise_conv1d(x, w, b, padding, dilation):
    """Depthwise conv (groups == channels); pure VPU work, left to XLA elementwise."""
    B, C, T = x.shape
    K = w.shape[-1]
    xp = jnp.pad(x, ((0, 0), (0, 0), (padding, padding)))
    out = jnp.zeros((B, C, T), x.dtype)
    for kk in range(K):
        out = out + xp[:, :, kk * dilation: kk * dilation + T] * w[None, :, 0, kk:kk + 1]
    return out + b[None, :, None]


# ----------------------------------------------------------------------------
# Small JAX helpers / parameter construction
# ----------------------------------------------------------------------------

def sequence_mask(lengths, max_len):
    return (jnp.arange(max_len)[None, :] < lengths[:, None]).astype(jnp.float32)


def layer_norm_c(x, gamma, beta, eps=1e-5):
    m = jnp.mean(x, axis=1, keepdims=True)
    v = jnp.mean((x - m) ** 2, axis=1, keepdims=True)
    return (x - m) * lax.rsqrt(v + eps) * gamma[None, :, None] + beta[None, :, None]


class ParamRNG:
    def __init__(self, seed):
        self.key = jax.random.PRNGKey(seed)

    def next(self):
        self.key, sub = jax.random.split(self.key)
        return sub


def winit(rng, shape, scale=0.02):
    return (scale * jax.random.normal(rng.next(), shape)).astype(jnp.float32)


def conv_params(rng, cout, cin, k, scale=0.02, bias=True):
    """Conv1d params with the matmul-layout weight precomputed once (no per-call reshape)."""
    w = winit(rng, (cout, cin, k), scale)
    p = {'wm': w.reshape(cout, cin * k).T, 'k': k}
    if bias:
        p['b'] = jnp.zeros((cout,), jnp.float32)
    return p


def convt_params(rng, cin, cout, k, scale=0.02):
    """ConvTranspose1d params, pre-flipped/transposed into matmul layout at build time."""
    w = winit(rng, (cin, cout, k), scale)
    w2 = jnp.transpose(w[:, :, ::-1], (1, 0, 2))          # (cout, cin, k), flipped taps
    return {'wm': w2.reshape(cout, cin * k).T, 'k': k,
            'b': jnp.zeros((cout,), jnp.float32)}


# ----------------------------------------------------------------------------
# WaveNet (WN) module
# ----------------------------------------------------------------------------

def wn_params(rng, hidden, kernel, n_layers, gin):
    p = {}
    if gin > 0:
        p['cond'] = conv_params(rng, 2 * hidden * n_layers, gin, 1)
    for i in range(n_layers):
        p[f'in{i}'] = conv_params(rng, 2 * hidden, hidden, kernel)
        out_ch = 2 * hidden if i < n_layers - 1 else hidden
        p[f'rs{i}'] = conv_params(rng, out_ch, hidden, 1)
    return p


def wavenet(x, x_mask, p, g, hidden, kernel, dilation_rate, n_layers):
    # TODO(synk): weight_norm and dropout inside WN are omitted (eval-mode semantics).
    output = jnp.zeros_like(x)
    g_all = conv1d(g, p['cond']) if g is not None else None   # (B, 2*h*L, 1)
    for i in range(n_layers):
        dil = dilation_rate ** i
        pad = (kernel * dil - dil) // 2
        x_in = conv1d(x, p[f'in{i}'], padding=pad, dilation=dil)
        xa, xb = x_in[:, :hidden], x_in[:, hidden:]
        if g_all is not None:
            g_l = g_all[:, i * 2 * hidden:(i + 1) * 2 * hidden, :]   # (B, 2h, 1)
            xa = xa + g_l[:, :hidden]      # broadcast over T; no zeros / broadcast_to
            xb = xb + g_l[:, hidden:]
        acts = pl_gate(xa, xb)
        rs = conv1d(acts, p[f'rs{i}'])
        if i < n_layers - 1:
            x = (x + rs[:, :hidden]) * x_mask
            output = output + rs[:, hidden:]
        else:
            output = output + rs
    return output * x_mask


# ----------------------------------------------------------------------------
# TextEncoder (enc_p)
# ----------------------------------------------------------------------------

def text_encoder_params(rng, cfg):
    h, f, k = cfg['hidden_channels'], cfg['filter_channels'], cfg['kernel_size']
    scale_q = (h // cfg['n_heads']) ** -0.5
    p = {'emb': winit(rng, (cfg['n_vocab'], h), h ** -0.5)}
    layers = []
    for _ in range(cfg['n_layers']):
        qkv = conv_params(rng, 3 * h, h, 1)               # fused Q/K/V projection
        # fold 1/sqrt(dh) into the Q columns of the fused QKV weight/bias (free at build time)
        qkv['wm'] = qkv['wm'].at[:, :h].multiply(scale_q)
        qkv['b'] = qkv['b'].at[:h].multiply(scale_q)
        layers.append({
            'qkv': qkv,
            'o': conv_params(rng, h, h, 1),
            'ln1_g': jnp.ones((h,), jnp.float32), 'ln1_b': jnp.zeros((h,), jnp.float32),
            'ffn1': conv_params(rng, f, h, k), 'ffn2': conv_params(rng, h, f, k),
            'ln2_g': jnp.ones((h,), jnp.float32), 'ln2_b': jnp.zeros((h,), jnp.float32),
        })
    p['layers'] = layers
    p['proj'] = conv_params(rng, 2 * cfg['inter_channels'], h, 1)
    return p


def mha(x, lp, n_heads, x_mask):
    B, C, T = x.shape
    qkv = conv1d(x, lp['qkv'])                               # one matmul for Q, K, V
    q, k, v = qkv[:, :C], qkv[:, C:2 * C], qkv[:, 2 * C:]
    dh = C // n_heads

    def split_heads(t):
        return t.reshape(B, n_heads, dh, T).transpose(0, 1, 3, 2)   # (B, H, T, dh)

    oh = pl_attention(split_heads(q), split_heads(k), split_heads(v), x_mask)  # (B, T, C)
    return conv1d(oh.transpose(0, 2, 1), lp['o'])


def text_encoder(x_tokens, x_lengths, g, p, cfg, rng):
    # TODO(synk): relative-position windowed attention, speaker_cond_layer injection
    #             and dropout are omitted.
    h, n_heads, k = cfg['hidden_channels'], cfg['n_heads'], cfg['kernel_size']
    B, Tx = x_tokens.shape
    x = p['emb'][x_tokens] * math.sqrt(h)          # (B, Tx, h)
    x = x.transpose(0, 2, 1)                       # (B, h, Tx)
    x_mask = sequence_mask(x_lengths, Tx)[:, None, :]
    x = x * x_mask
    for lp in p['layers']:
        y = mha(x, lp, n_heads, x_mask)            # attention bias built in-kernel from x_mask
        x = layer_norm_c(x + y, lp['ln1_g'], lp['ln1_b'])
        y = conv1d(x * x_mask, lp['ffn1'], padding=k // 2, activation='relu')  # fused relu
        y = conv1d(y * x_mask, lp['ffn2'], padding=k // 2)
        y = y * x_mask
        x = layer_norm_c(x + y, lp['ln2_g'], lp['ln2_b'])
    x = x * x_mask
    stats = conv1d(x, p['proj']) * x_mask
    ic = cfg['inter_channels']
    m, logs = stats[:, :ic], stats[:, ic:]
    z = (m + jax.random.normal(rng.next(), m.shape) * jnp.exp(logs)) * x_mask
    return z, m, logs, x, x_mask


# ----------------------------------------------------------------------------
# PosteriorEncoder (enc_q)
# ----------------------------------------------------------------------------

def posterior_encoder_params(rng, cfg):
    h = cfg['hidden_channels']
    return {'pre': conv_params(rng, h, cfg['spec_channels'], 1),
            'wn': wn_params(rng, h, 5, cfg['n_layers_q'], cfg['gin_channels']),
            'proj': conv_params(rng, 2 * cfg['inter_channels'], h, 1)}


def posterior_encoder(y, y_lengths, g, p, cfg, rng):
    B, _, Ty = y.shape
    y_mask = sequence_mask(y_lengths, Ty)[:, None, :]
    x = conv1d(y, p['pre']) * y_mask
    x = wavenet(x, y_mask, p['wn'], g, cfg['hidden_channels'], 5, 1, cfg['n_layers_q'])
    stats = conv1d(x, p['proj']) * y_mask
    ic = cfg['inter_channels']
    m, logs = stats[:, :ic], stats[:, ic:]
    z = (m + jax.random.normal(rng.next(), m.shape) * jnp.exp(logs)) * y_mask
    return z, m, logs, y_mask


# ----------------------------------------------------------------------------
# Residual coupling flow (flow)
# ----------------------------------------------------------------------------

def flow_params(rng, cfg):
    flows = []
    half = cfg['inter_channels'] // 2
    h = cfg['hidden_channels']
    for _ in range(cfg['n_flows']):
        flows.append({'pre': conv_params(rng, h, half, 1),
                      'wn': wn_params(rng, h, 5, 4, cfg['gin_channels']),
                      'post': conv_params(rng, 2 * half, h, 1)})
    return flows


def coupling(z, m, logs, x_mask, fp, g, cfg, reverse):
    # TODO(synk): exact stats-propagation of this repo's flow(z, m, logs, ...) is unknown;
    #             the affine coupling is applied consistently to z, m and logs.
    half = cfg['inter_channels'] // 2
    h = cfg['hidden_channels']
    z0, z1 = z[:, :half], z[:, half:]
    m0, m1 = m[:, :half], m[:, half:]
    l0, l1 = logs[:, :half], logs[:, half:]
    hh = conv1d(z0, fp['pre']) * x_mask
    hh = wavenet(hh, x_mask, fp['wn'], g, h, 5, 1, 4)
    stats = conv1d(hh, fp['post']) * x_mask
    mm, ll = stats[:, :half], stats[:, half:]
    if not reverse:
        z1n = (mm + z1 * jnp.exp(ll)) * x_mask
        m1n = (mm + m1 * jnp.exp(ll)) * x_mask
        l1n = (l1 + ll) * x_mask
    else:
        z1n = (z1 - mm) * jnp.exp(-ll) * x_mask
        m1n = (m1 - mm) * jnp.exp(-ll) * x_mask
        l1n = (l1 - ll) * x_mask
    cat = lambda a, b: jnp.concatenate([a, b], axis=1)
    return cat(z0, z1n), cat(m0, m1n), cat(l0, l1n)


def residual_coupling_block(z, m, logs, x_mask, flows_p, g, cfg, reverse=False):
    # TODO(synk): use_transformer_flow (transformer coupling pre-flow) is not implemented.
    flip = lambda t: t[:, ::-1, :]
    if not reverse:
        for fp in flows_p:
            z, m, logs = coupling(z, m, logs, x_mask, fp, g, cfg, reverse=False)
            z, m, logs = flip(z), flip(m), flip(logs)
    else:
        for fp in reversed(flows_p):
            z, m, logs = flip(z), flip(m), flip(logs)
            z, m, logs = coupling(z, m, logs, x_mask, fp, g, cfg, reverse=True)
    return z, m, logs


# ----------------------------------------------------------------------------
# Generator (dec, HiFi-GAN style)
# ----------------------------------------------------------------------------

def generator_params(rng, cfg):
    uic = cfg['upsample_initial_channel']
    p = {'pre': conv_params(rng, uic, cfg['inter_channels'], 7)}
    if cfg['gin_channels'] > 0:
        p['cond'] = conv_params(rng, uic, cfg['gin_channels'], 1)
    ups, resblocks = [], []
    ch = uic
    for (u, k) in zip(cfg['upsample_rates'], cfg['upsample_kernel_sizes']):
        ups.append(convt_params(rng, ch, ch // 2, k))
        ch //= 2
        for kr, dils in zip(cfg['resblock_kernel_sizes'], cfg['resblock_dilation_sizes']):
            rb = []
            for d in dils:
                rb.append({'c1': conv_params(rng, ch, ch, kr),
                           'c2': conv_params(rng, ch, ch, kr), 'k': kr, 'd': d})
            resblocks.append(rb)
    p['ups'] = ups
    p['resblocks'] = resblocks
    p['post'] = conv_params(rng, 1, ch, 7, bias=False)
    return p


def resblock1(x, rb):
    # leaky_relu is fused into the following conv's matmul kernel as a pre-activation on the
    # A operand (leaky_relu(0)=0 so zero-padding stays exact).
    for blk in rb:
        k, d = blk['k'], blk['d']
        xt = conv1d(x, blk['c1'], padding=(k * d - d) // 2, dilation=d, pre_act='lrelu_0.1')
        xt = conv1d(xt, blk['c2'], padding=(k - 1) // 2, pre_act='lrelu_0.1')
        x = x + xt
    return x


def generator(z, g, p, cfg):
    x = conv1d(z, p['pre'], padding=3)
    if g is not None:
        x = x + conv1d(g, p['cond'])
    num_kernels = len(cfg['resblock_kernel_sizes'])
    for i, (u, k) in enumerate(zip(cfg['upsample_rates'], cfg['upsample_kernel_sizes'])):
        # leaky_relu fused into the transposed conv (pre_act); zero-stuffed taps unaffected.
        x = conv_transpose1d(x, p['ups'][i], stride=u, padding=(k - u) // 2,
                             pre_act='lrelu_0.1')
        xs = None
        for j in range(num_kernels):
            r = resblock1(x, p['resblocks'][i * num_kernels + j])
            xs = r if xs is None else xs + r
        x = xs / num_kernels
    # final leaky_relu (slope 0.01) + conv + tanh fused into one matmul call
    return conv1d(x, p['post'], padding=3, pre_act='lrelu_0.01', activation='tanh')


# ----------------------------------------------------------------------------
# Stochastic duration predictor (dp)
# ----------------------------------------------------------------------------

def dds_params(rng, channels, kernel, n_layers):
    p = {}
    for i in range(n_layers):
        p[f'dw{i}'] = {'w': winit(rng, (channels, 1, kernel)),
                       'b': jnp.zeros((channels,), jnp.float32)}
        p[f'pw{i}'] = conv_params(rng, channels, channels, 1)
        p[f'ln1g{i}'] = jnp.ones((channels,), jnp.float32)
        p[f'ln1b{i}'] = jnp.zeros((channels,), jnp.float32)
        p[f'ln2g{i}'] = jnp.ones((channels,), jnp.float32)
        p[f'ln2b{i}'] = jnp.zeros((channels,), jnp.float32)
    return p


def dds_conv(x, x_mask, p, n_layers, kernel, g=None):
    # TODO(synk): dropout inside DDSConv is omitted.
    if g is not None:
        x = x + g
    for i in range(n_layers):
        dil = kernel ** i
        pad = ((kernel - 1) * dil) // 2
        y = depthwise_conv1d(x * x_mask, p[f'dw{i}']['w'], p[f'dw{i}']['b'], pad, dil)
        y = layer_norm_c(y, p[f'ln1g{i}'], p[f'ln1b{i}'])
        y = jax.nn.gelu(y)
        y = conv1d(y, p[f'pw{i}'])
        y = layer_norm_c(y, p[f'ln2g{i}'], p[f'ln2b{i}'])
        y = jax.nn.gelu(y)
        x = x + y
    return x * x_mask


def sdp_params(rng, cfg):
    f = cfg['hidden_channels']  # filter_channels == hidden_channels in this config
    p = {'pre': conv_params(rng, f, cfg['hidden_channels'], 1),
         'proj': conv_params(rng, f, f, 1),
         'convs': dds_params(rng, f, 3, 3),
         'post_pre': conv_params(rng, f, 1, 1),
         'post_proj': conv_params(rng, f, f, 1),
         'post_convs': dds_params(rng, f, 3, 3),
         'ea': {'m': jnp.zeros((2, 1), jnp.float32), 'logs': jnp.zeros((2, 1), jnp.float32)},
         'post_ea': {'m': jnp.zeros((2, 1), jnp.float32), 'logs': jnp.zeros((2, 1), jnp.float32)}}
    if cfg['gin_channels'] > 0:
        p['cond'] = conv_params(rng, f, cfg['gin_channels'], 1)
    for name in ['flow', 'post_flow']:
        for i in range(4):
            p[f'{name}{i}'] = {'pre': conv_params(rng, f, 1, 1),
                               'dds': dds_params(rng, f, 3, 3),
                               'proj': conv_params(rng, 2, f, 1)}
    return p


def elementwise_affine(x, x_mask, p):
    y = (p['m'][None] + jnp.exp(p['logs'])[None] * x) * x_mask
    logdet = jnp.sum(p['logs'][None] * x_mask, axis=(1, 2))
    return y, logdet


def sdp_coupling(x, x_mask, p, g, reverse=False):
    # TODO(synk): original ConvFlow uses a piecewise-rational-quadratic spline;
    #             replaced here by an affine coupling with the same conv stack.
    x0, x1 = x[:, :1], x[:, 1:]
    h = conv1d(x0, p['pre'])
    h = dds_conv(h, x_mask, p['dds'], n_layers=3, kernel=3, g=g)
    stats = conv1d(h, p['proj']) * x_mask
    mm, ll = stats[:, :1], jnp.tanh(stats[:, 1:])
    if not reverse:
        x1 = (mm + x1 * jnp.exp(ll)) * x_mask
        logdet = jnp.sum(ll * x_mask, axis=(1, 2))
        return jnp.concatenate([x0, x1], axis=1), logdet
    x1 = (x1 - mm) * jnp.exp(-ll) * x_mask
    return jnp.concatenate([x0, x1], axis=1), None


def sdp_forward(h_text, x_mask, w, g, p, cfg, rng):
    B, _, T = w.shape
    x = lax.stop_gradient(h_text)
    x = conv1d(x, p['pre'])
    if g is not None:
        x = x + conv1d(lax.stop_gradient(g), p['cond'])
    x = dds_conv(x, x_mask, p['convs'], n_layers=3, kernel=3)
    x = conv1d(x, p['proj']) * x_mask

    h_w = conv1d(w, p['post_pre'])
    h_w = dds_conv(h_w, x_mask, p['post_convs'], n_layers=3, kernel=3)
    h_w = conv1d(h_w, p['post_proj']) * x_mask

    e_q = jax.random.normal(rng.next(), (B, 2, T)) * x_mask
    z_q = e_q
    logdet_tot_q = jnp.zeros((B,), jnp.float32)
    z_q, ld = elementwise_affine(z_q, x_mask, p['post_ea'])
    logdet_tot_q += ld
    cond_q = x + h_w
    for i in range(4):
        z_q, ld = sdp_coupling(z_q, x_mask, p[f'post_flow{i}'], cond_q)
        logdet_tot_q += ld
        z_q = z_q[:, ::-1, :]
    z_u, z1 = z_q[:, :1], z_q[:, 1:]
    u = jax.nn.sigmoid(z_u) * x_mask
    z0 = (w - u) * x_mask
    logdet_tot_q += jnp.sum((jax.nn.log_sigmoid(z_u) + jax.nn.log_sigmoid(-z_u)) * x_mask,
                            axis=(1, 2))
    logq = jnp.sum(-0.5 * (math.log(2 * math.pi) + e_q ** 2) * x_mask, axis=(1, 2)) \
        - logdet_tot_q

    logdet_tot = jnp.zeros((B,), jnp.float32)
    z0 = jnp.log(jnp.maximum(z0, 1e-5)) * x_mask
    logdet_tot += jnp.sum(-z0, axis=(1, 2))
    z = jnp.concatenate([z0, z1], axis=1)
    z, ld = elementwise_affine(z, x_mask, p['ea'])
    logdet_tot += ld
    for i in range(4):
        z, ld = sdp_coupling(z, x_mask, p[f'flow{i}'], x)
        logdet_tot += ld
        z = z[:, ::-1, :]
    nll = jnp.sum(0.5 * (math.log(2 * math.pi) + z ** 2) * x_mask, axis=(1, 2)) - logdet_tot
    return nll + logq


# ----------------------------------------------------------------------------
# Monotonic alignment search (search_path)
# ----------------------------------------------------------------------------

_NEG = -1e9


def maximum_path(value, mask):
    """value, mask: (B, Ty, Tx)."""
    # TODO(synk): the MAS forward/backtracking DP is inherently sequential; kept in lax.scan.
    B, Ty, Tx = value.shape
    value = value * mask
    t_ys = jnp.sum(mask[:, :, 0], axis=1).astype(jnp.int32)
    t_xs = jnp.sum(mask[:, 0, :], axis=1).astype(jnp.int32)

    def single(v, t_y, t_x):
        def fwd(prev, inp):
            yidx, row = inp
            shifted = jnp.concatenate([jnp.full((1,), _NEG, v.dtype), prev[:-1]])
            best = jnp.maximum(prev, shifted)
            first = jnp.where(jnp.arange(Tx) == 0, row, _NEG)
            cur = jnp.where(yidx == 0, first, row + best)
            return cur, cur

        _, Q = lax.scan(fwd, jnp.full((Tx,), _NEG, v.dtype), (jnp.arange(Ty), v))

        def bwd(index, yidx):
            active = yidx < t_y
            row = jnp.where(active,
                            (jnp.arange(Tx) == index).astype(v.dtype),
                            jnp.zeros((Tx,), v.dtype))
            qprev = Q[jnp.maximum(yidx - 1, 0)]
            move = active & (yidx > 0) & (index != 0) & \
                ((index == yidx) | (qprev[index] < qprev[index - 1]))
            return jnp.where(move, index - 1, index), row

        _, rows = lax.scan(bwd, t_x - 1, jnp.arange(Ty - 1, -1, -1))
        return rows[::-1]

    return jax.vmap(single)(value, t_ys, t_xs)


def search_path(z_p, m_p, logs_p, x_mask, y_mask, mas_noise_scale, rng):
    """MAS Gaussian log-likelihood: one fused batched matmul (l2 and l3 share a single call).
    Kept in f32 so bf16 rounding cannot flip near-tie alignment decisions."""
    o_scale = jnp.exp(-2.0 * logs_p)                                   # (B, D, Tx)
    logp1 = jnp.sum(-0.5 * math.log(2 * math.pi) - logs_p, axis=1)     # (B, Tx)
    logp4 = jnp.sum(-0.5 * (m_p ** 2) * o_scale, axis=1)               # (B, Tx)
    lhs = jnp.concatenate([-0.5 * (z_p ** 2), z_p], axis=1).transpose(0, 2, 1)  # (B, Ty, 2D)
    rhs = jnp.concatenate([o_scale, m_p * o_scale], axis=1)            # (B, 2D, Tx)
    logp = pl_bmm(lhs, rhs, dtype=jnp.float32) + (logp1 + logp4)[:, None, :]    # (B, Ty, Tx)
    if mas_noise_scale > 0.0:
        eps = jnp.std(logp, ddof=1) * jax.random.normal(rng.next(), logp.shape) \
            * mas_noise_scale
        logp = logp + eps
    attn_mask = y_mask[:, 0, :, None] * x_mask[:, 0, None, :]          # (B, Ty, Tx)
    attn = maximum_path(logp, attn_mask)
    return attn[:, None]                                               # (B, 1, Ty, Tx)


def rand_slice_segments(x, x_lengths, segment_size, key):
    B, C, T = x.shape
    ids_str_max = jnp.maximum(x_lengths - segment_size + 1, 1)
    ids = (jax.random.uniform(key, (B,)) * ids_str_max).astype(jnp.int32)
    segs = jax.vmap(lambda xb, i: lax.dynamic_slice(xb, (0, i), (C, segment_size)))(x, ids)
    return segs, ids


# ----------------------------------------------------------------------------
# SynthesizerTrn
# ----------------------------------------------------------------------------

def build_params(rng, cfg):
    params = {'enc_p': text_encoder_params(rng, cfg),
              'enc_q': posterior_encoder_params(rng, cfg),
              'flow': flow_params(rng, cfg),
              'dec': generator_params(rng, cfg),
              'dp': sdp_params(rng, cfg)}
    if cfg['n_speakers'] > 1:
        params['emb_g'] = winit(rng, (cfg['n_speakers'], cfg['gin_channels']), 1.0)
    return params


def synthesizer_forward(params, cfg, x, x_lengths, y, y_lengths, sid, rng):
    if cfg['n_speakers'] > 0:
        g = params['emb_g'][sid][:, :, None]              # (B, gin, 1)
    else:
        g = None

    z_p_text, m_p_text, logs_p_text, h_text, x_mask = text_encoder(
        x, x_lengths, g, params['enc_p'], cfg, rng)
    z_q_audio, m_q_audio, logs_q_audio, y_mask = posterior_encoder(
        y, y_lengths, g, params['enc_q'], cfg, rng)
    z_q_dur, m_q_dur, logs_q_dur = residual_coupling_block(
        z_q_audio, m_q_audio, logs_q_audio, y_mask, params['flow'], g, cfg, reverse=False)

    attn = search_path(z_q_dur, m_p_text, logs_p_text, x_mask, y_mask,
                       cfg['mas_noise_scale'], rng)
    w = jnp.sum(attn, axis=2)                              # (B, 1, Tx)

    l_length = sdp_forward(h_text, x_mask, w, g, params['dp'], cfg, rng)
    l_length = l_length / jnp.sum(x_mask)

    # alignment expansion of (m, logs) fused into one batch-gridded matmul
    ic = cfg['inter_channels']
    attn_sq = attn[:, 0]                                   # (B, Ty, Tx)
    stats_t = jnp.concatenate([m_p_text, logs_p_text], axis=1).transpose(0, 2, 1)
    expanded = pl_bmm(attn_sq, stats_t).transpose(0, 2, 1)  # (B, 2*ic, Ty)
    m_p_dur, logs_p_dur = expanded[:, :ic], expanded[:, ic:]
    z_p_dur = m_p_dur + jax.random.normal(rng.next(), m_p_dur.shape) \
        * jnp.exp(logs_p_dur) * y_mask
    z_p_audio, m_p_audio, logs_p_audio = residual_coupling_block(
        z_p_dur, m_p_dur, logs_p_dur, y_mask, params['flow'], g, cfg, reverse=True)

    z_slice, ids_slice = rand_slice_segments(z_q_audio, y_lengths,
                                             cfg['segment_size'], rng.next())
    o = generator(z_slice, g, params['dec'], cfg)
    return (o, l_length, attn, ids_slice, x_mask, y_mask,
            (m_p_text, logs_p_text),
            (m_p_dur, logs_p_dur, z_q_dur, logs_q_dur),
            (m_p_audio, logs_p_audio, m_q_audio, logs_q_audio))


# ----------------------------------------------------------------------------
# Main
# ----------------------------------------------------------------------------

if __name__ == "__main__":
    cfg = dict(
        n_vocab=40, spec_channels=16, segment_size=8,
        inter_channels=8, hidden_channels=16, filter_channels=32,
        n_heads=2, n_layers=2, n_layers_q=2, n_flows=2, kernel_size=3,
        p_dropout=0.0, speaker_cond_layer=0,
        resblock='1', resblock_kernel_sizes=[3], resblock_dilation_sizes=[[1, 3]],
        upsample_rates=[2, 2], upsample_initial_channel=16, upsample_kernel_sizes=[4, 4],
        mas_noise_scale=0.01, mas_noise_scale_decay=2e-6,
        use_sdp=True, use_transformer_flow=False,
        n_speakers=4, gin_channels=8,
    )

    param_rng = ParamRNG(42)
    params = build_params(param_rng, cfg)

    key = jax.random.PRNGKey(0)
    kx, ky = jax.random.split(key)
    B, Tx, Ty = 2, 8, 16
    x = jax.random.randint(kx, (B, Tx), 0, cfg['n_vocab'], dtype=jnp.int32)
    x_lengths = jnp.array([8, 6], jnp.int32)
    y = jax.random.normal(ky, (B, cfg['spec_channels'], Ty), jnp.float32)
    y_lengths = jnp.array([16, 12], jnp.int32)
    sid = jnp.array([0, 2], jnp.int32)

    noise_rng = ParamRNG(1234)  # runtime randn_like / rand_slice noise (deterministic)
    outputs = synthesizer_forward(params, cfg, x, x_lengths, y, y_lengths, sid, noise_rng)
    jax.block_until_ready(outputs)

    o = outputs[0]
    assert o.shape == (B, 1, cfg['segment_size'] * 4)
    assert outputs[2].shape == (B, 1, Ty, Tx)
    print("KERNEL_OK")
</pallas_src>

<mosaic_0001>
module attributes {stable_mosaic.version = 11 : i64} {
  func.func @_lambda_(%arg0: i32, %arg1: i32, %arg2: i32, %arg3: memref<16x16xbf16, #tpu.memory_space<vmem>>, %arg4: memref<16x48xbf16, #tpu.memory_space<vmem>>, %arg5: memref<1x48xf32, #tpu.memory_space<vmem>>, %arg6: memref<16x48xf32, #tpu.memory_space<vmem>>) attributes {dimension_semantics = [#tpu.dimension_semantics<parallel>, #tpu.dimension_semantics<parallel>, #tpu.dimension_semantics<arbitrary>], iteration_bounds = array<i64: 1, 1, 1>, scalar_prefetch = 0 : i64, scratch_operands = 0 : i64, tpu.core_type = #tpu.core_type<tc>, window_params = [{transform_indices = @transform_0, window_bounds = array<i64: 16, 16>}, {transform_indices = @transform_1, window_bounds = array<i64: 16, 48>}, {transform_indices = @transform_2, window_bounds = array<i64: 1, 48>}, {transform_indices = @transform_3, window_bounds = array<i64: 16, 48>}]} {
    %c0_i32 = arith.constant 0 : i32
    %0 = arith.cmpi eq, %arg2, %c0_i32 : i32
    %1 = arith.extui %0 : i1 to i32
    %c0_i32_0 = arith.constant 0 : i32
    %2 = arith.cmpi ne, %1, %c0_i32_0 : i32
    scf.if %2 {
      %cst_10 = arith.constant 0.000000e+00 : f32
      %12 = vector.broadcast %cst_10 : f32 to vector<16x48xf32>
      %c0_11 = arith.constant 0 : index
      %c0_12 = arith.constant 0 : index
      %13 = vector.load %arg6[%c0_11, %c0_12] : memref<16x48xf32, #tpu.memory_space<vmem>>, vector<16x48xf32>
      tpu.vector_store %arg6[%c0_11, %c0_12], %12 {strides = array<i32>} : memref<16x48xf32, #tpu.memory_space<vmem>>, vector<16x48xf32>,
    } else {
    }
    %c0 = arith.constant 0 : index
    %c0_1 = arith.constant 0 : index
    %3 = vector.load %arg3[%c0, %c0_1] : memref<16x16xbf16, #tpu.memory_space<vmem>>, vector<16x16xbf16>
    %c0_2 = arith.constant 0 : index
    %c0_3 = arith.constant 0 : index
    %4 = vector.load %arg6[%c0_2, %c0_3] : memref<16x48xf32, #tpu.memory_space<vmem>>, vector<16x48xf32>
    %c0_4 = arith.constant 0 : index
    %c0_5 = arith.constant 0 : index
    %5 = vector.load %arg4[%c0_4, %c0_5] : memref<16x48xbf16, #tpu.memory_space<vmem>>, vector<16x48xbf16>
    %cst = arith.constant dense<0.000000e+00> : vector<16x48xf32>
    %6 = tpu.matmul %3, %5, %cst {dimension_numbers = #tpu.dot_dimension_numbers<[1], [0], [0], [1], [0, 0, 1, 1], [], []>} : vector<16x16xbf16>, vector<16x48xbf16>, vector<16x48xf32> -> vector<16x48xf32>
    %7 = arith.addf %4, %6 : vector<16x48xf32>
    %c0_6 = arith.constant 0 : index
    %c0_7 = arith.constant 0 : index
    %8 = vector.load %arg6[%c0_6, %c0_7] : memref<16x48xf32, #tpu.memory_space<vmem>>, vector<16x48xf32>
    tpu.vector_store %arg6[%c0_6, %c0_7], %7 {strides = array<i32>} : memref<16x48xf32, #tpu.memory_space<vmem>>, vector<16x48xf32>,
    %c0_i32_8 = arith.constant 0 : i32
    %9 = arith.cmpi eq, %arg2, %c0_i32_8 : i32
    %10 = arith.extui %9 : i1 to i32
    %c0_i32_9 = arith.constant 0 : i32
    %11 = arith.cmpi ne, %10, %c0_i32_9 : i32
    scf.if %11 {
      %c0_10 = arith.constant 0 : index
      %c0_11 = arith.constant 0 : index
      %12 = vector.load %arg6[%c0_10, %c0_11] : memref<16x48xf32, #tpu.memory_space<vmem>>, vector<16x48xf32>
      %c0_12 = arith.constant 0 : index
      %c0_13 = arith.constant 0 : index
      %13 = vector.load %arg5[%c0_12, %c0_13] : memref<1x48xf32, #tpu.memory_space<vmem>>, vector<1x48xf32>
      %14 = vector.broadcast %13 : vector<1x48xf32> to vector<16x48xf32>
      %15 = arith.addf %12, %14 : vector<16x48xf32>
      %c0_14 = arith.constant 0 : index
      %c0_15 = arith.constant 0 : index
      %16 = vector.load %arg6[%c0_14, %c0_15] : memref<16x48xf32, #tpu.memory_space<vmem>>, vector<16x48xf32>
      tpu.vector_store %arg6[%c0_14, %c0_15], %15 {strides = array<i32>} : memref<16x48xf32, #tpu.memory_space<vmem>>, vector<16x48xf32>,
    } else {
    }
    return
  }
  func.func @transform_0(%arg0: i32, %arg1: i32, %arg2: i32) -> (i32, i32) {
    %c0_i32 = arith.constant 0 : i32
    return %arg0, %arg2 : i32, i32
  }
  func.func @transform_1(%arg0: i32, %arg1: i32, %arg2: i32) -> (i32, i32) {
    %c0_i32 = arith.constant 0 : i32
    return %arg2, %arg1 : i32, i32
  }
  func.func @transform_2(%arg0: i32, %arg1: i32, %arg2: i32) -> (i32, i32) {
    %c0_i32 = arith.constant 0 : i32
    %c0_i32_0 = arith.constant 0 : i32
    return %c0_i32, %arg1 : i32, i32
  }
  func.func @transform_3(%arg0: i32, %arg1: i32, %arg2: i32) -> (i32, i32) {
    %c0_i32 = arith.constant 0 : i32
    return %arg0, %arg1 : i32, i32
  }
}

</mosaic_0001>

<llo_original>
// kernel: tpu_custom_call.1
$region0: #{tpu_custom_call.1}
  #allocation0 [shape = 'u32[]', space=smem, size = 0x4, offset = 0x4, fixed_abs, tag = 'smem constant byte address 0x4 - core index']
  #allocation1 [shape = 'u32[144,128]{1,0:T(1,128)}', space=vmem, size = 0x12000, scoped, tag = 'internal scratch']
  %s0 = inlined_call_operand.hbm [shape: bf16[16,16], index: 0, kind: input, shape index: {}]
  %s1 = inlined_call_operand.hbm [shape: bf16[16,48], index: 1, kind: input, shape index: {}]
  %s2 = inlined_call_operand.vmem [shape: f32[1,48], index: 2, kind: input, shape index: {}]
  %s3 = inlined_call_operand.hbm [shape: f32[16,48], index: 3, kind: output, shape index: {}]
  %s4 = sld [smem:[#allocation0]]
  $region38: #{tpu_custom_call.1} parent=0
    _
  %s6 = ssub.s32 1, %s4
  %s7 = scalar_select 0, %s6, %s4
  $region1: #{tpu_custom_call.1} parent=0
    #allocation2 [shape = 'u8[4096]{0}', space=vmem, size = 0x1000, scoped, tag = 'input window, operand 0, single buffered']
    #allocation3 [shape = 's32[1]{0}', space=sflag, size = 0x4, scoped, tag = 'scoped memory for tpu_custom_call.1']
    #allocation4 [shape = 's32[1]{0}', space=sflag, size = 0x4, scoped, tag = 'scoped memory for tpu_custom_call.1']
    #allocation5 [shape = 'u8[4096]{0}', space=vmem, size = 0x1000, scoped, tag = 'input window, operand 1, single buffered']
    #allocation6 [shape = 's32[1]{0}', space=sflag, size = 0x4, scoped, tag = 'scoped memory for tpu_custom_call.1']
    #allocation7 [shape = 'u8[8192]{0}', space=vmem, size = 0x2000, scoped, tag = 'output window, operand 0, single buffered']
    %8 = vsyncpa [#allocation3], 0
    %9 = vsyncpa [#allocation6], 0
    %10 = vsyncpa [#allocation4], 0
    // Predicated region
    $region2: #{tpu_custom_call.1} parent=1 // pred_check
      _
    $region3: #{tpu_custom_call.1} parent=1 // pred_check_branch
      %12 = sbr.rel (0) target = $region5
    $region4: #{tpu_custom_call.1} parent=1 // pred_region
      %s14 = ssub.s32 128, 128
      %15 = vsyncadd [#allocation3], %s14
      %s16 = sshll.u32 [#allocation2], 4
      %s17 = int_to_ptr.vmem [resolvable:$true] %s16
      %22 = dma.hbm_to_vmem [thread:$0]  %s0, 128, %s17, [#allocation3], 64, 64, 4
    $region5: #{tpu_custom_call.1} parent=1 // pred_fallthru
      _
    // Predicated region
    $region6: #{tpu_custom_call.1} parent=1 // pred_check
      _
    $region7: #{tpu_custom_call.1} parent=1 // pred_check_branch
      %24 = sbr.rel (0) target = $region9
    $region8: #{tpu_custom_call.1} parent=1 // pred_region
      %s26 = ssub.s32 128, 128
      %27 = vsyncadd [#allocation6], %s26
      %s28 = sshll.u32 [#allocation5], 4
      %s29 = int_to_ptr.vmem [resolvable:$true] %s28
      %34 = dma.hbm_to_vmem [thread:$0]  %s1, 128, %s29, [#allocation6], 64, 64, 4
    $region9: #{tpu_custom_call.1} parent=1 // pred_fallthru
      _
    // Predicated region
    $region10: #{tpu_custom_call.1} parent=1 // pred_check
      _
    $region11: #{tpu_custom_call.1} parent=1 // pred_check_branch
      %36 = sbr.rel (0) target = $region13
    $region12: #{tpu_custom_call.1} parent=1 // pred_region
      _
    $region13: #{tpu_custom_call.1} parent=1 // pred_fallthru
      _
    // Predicated region
    $region14: #{tpu_custom_call.1} parent=1 // pred_check
      _
    $region15: #{tpu_custom_call.1} parent=1 // pred_check_branch
      %38 = sbr.rel (0) target = $region17
    $region16: #{tpu_custom_call.1} parent=1 // pred_region
      %39 = dma.done [#allocation3], 128
    $region17: #{tpu_custom_call.1} parent=1 // pred_fallthru
      _
    // Predicated region
    $region18: #{tpu_custom_call.1} parent=1 // pred_check
      _
    $region19: #{tpu_custom_call.1} parent=1 // pred_check_branch
      %41 = sbr.rel (0) target = $region21
    $region20: #{tpu_custom_call.1} parent=1 // pred_region
      %42 = dma.done [#allocation6], 128
    $region21: #{tpu_custom_call.1} parent=1 // pred_fallthru
      _
    %p44 = scmp.eq.s32.totalorder 0, 0
    // Predicated region
    $region22: #{tpu_custom_call.1} parent=1 // pred_check
      %p45 = pneg %p44
    $region23: #{tpu_custom_call.1} parent=1 // pred_check_branch
      %47 = sbr.rel (%p45) target = $region25
    $region24: #{tpu_custom_call.1} parent=1 // pred_region
      %vm48 = vcmask 392192
      %49 = vst.msk [vmem:[#allocation7] sm:$0xff] %vm48, 0.0
      %50 = vst.msk [vmem:[#allocation7 + $0x8] sm:$0xff] %vm48, 0.0
    $region25: #{tpu_custom_call.1} parent=1 // pred_fallthru
      _
    %v51 = vld [vmem:[#allocation2] sm:$0xf]
    %v52 = vld [vmem:[#allocation2 + $0x4] sm:$0xf]
    %v53 = vld [vmem:[#allocation7] sm:$0xff]
    %v54 = vld [vmem:[#allocation7 + $0x8] sm:$0xff]
    %v55 = vld [vmem:[#allocation5] sm:$0xf]
    %v56 = vld [vmem:[#allocation5 + $0x4] sm:$0xf]
    %v59 = vunpack.c.l.b16 %v51
    %v60 = vunpack.c.l.b16 %v52
    %v61 = vpack.c.b16 %v60, %v59
    %v64 = vunpack.c.l.b16 %v55
    %v65 = vunpack.c.l.b16 %v56
    %v66 = vpack.c.b16 %v65, %v64
    %vm68 = vcmask 130048
    %v70 = vsel %vm68, %v61, 0
    %72 = vmatprep.subr.bf16.mxu0 0
    %73 = vmatpush1.bf16.msra.mxu0 %v66
    %74 = vmatprep.subr.bf16.mxu0 0
    %75 = vmatpush1.bf16.msra.mxu0 0
    %76 = vmatprep.subr.bf16.mxu0 0
    %77 = vmatpush1.bf16.msra.mxu0 0
    %78 = vmatprep.subr.bf16.mxu0 0
    %79 = vmatpush1.bf16.msra.mxu0 0
    %80 = vmatprep.subr.bf16.mxu0 0
    %81 = vmatpush1.bf16.msra.mxu0 0
    %82 = vmatprep.subr.bf16.mxu0 0
    %83 = vmatpush1.bf16.msra.mxu0 0
    %84 = vmatprep.subr.bf16.mxu0 0
    %85 = vmatpush1.bf16.msra.mxu0 0
    %86 = vmatprep.subr.bf16.mxu0 0
    %87 = vmatpush1.bf16.msra.mxu0 0
    %88 = vmatprep.subr.bf16.mxu0 0
    %89 = vmatpush1.bf16.msra.mxu0 0
    %90 = vmatprep.subr.bf16.mxu0 0
    %91 = vmatpush1.bf16.msra.mxu0 0
    %92 = vmatprep.subr.bf16.mxu0 0
    %93 = vmatpush1.bf16.msra.mxu0 0
    %94 = vmatprep.subr.bf16.mxu0 0
    %95 = vmatpush1.bf16.msra.mxu0 0
    %96 = vmatprep.subr.bf16.mxu0 0
    %97 = vmatpush1.bf16.msra.mxu0 0
    %98 = vmatprep.subr.bf16.mxu0 0
    %99 = vmatpush1.bf16.msra.mxu0 0
    %100 = vmatprep.subr.bf16.mxu0 0
    %101 = vmatpush1.bf16.msra.mxu0 0
    %102 = vmatprep.subr.bf16.mxu0 0
    %103 = vmatpush1.bf16.msra.mxu0 0
    %104 = vmatprep.mubr.bf16.mxu0 0
    %105 = vmatmul.mubr.bf16.gmra.mrb[0].mxu0 %v70
    %v106 = vpop.f32.mrb[0].mxu0
    %v107 = vadd.f32 0.0, %v106
    %v108 = vpop.f32.mrb[0].mxu0
    %v109 = vpop.f32.mrb[0].mxu0
    %v110 = vadd.f32 0.0, %v109
    %v111 = vpop.f32.mrb[0].mxu0
    %112 = vdwg.mxu0
    %v113 = vadd.f32 %v53, %v107
    %v114 = vadd.f32 %v54, %v110
    %vm115 = vcmask 392192
    %116 = vst.msk [vmem:[#allocation7] sm:$0xff] %vm115, %v113
    %117 = vst.msk [vmem:[#allocation7 + $0x8] sm:$0xff] %vm115, %v114
    // Predicated region
    $region26: #{tpu_custom_call.1} parent=1 // pred_check
      %p118 = pneg %p44
    $region27: #{tpu_custom_call.1} parent=1 // pred_check_branch
      %120 = sbr.rel (%p118) target = $region29
    $region28: #{tpu_custom_call.1} parent=1 // pred_region
      %v121 = vld [vmem:[#allocation7] sm:$0xff]
      %v122 = vld [vmem:[#allocation7 + $0x8] sm:$0xff]
      %v123 = vld [vmem:[%s2] sm:$0x1]
      %v125 = vlaneseq
      %v126 = vshrl.u32 %v125, 7
      %v127 = vsub.s32 0, %v126
      %v128 = vrot.slane %v123, %v127
      %v130 = vadd.f32 %v121, %v128
      %v131 = vadd.f32 %v122, %v128
      %132 = vst.msk [vmem:[#allocation7] sm:$0xff] %vm115, %v130
      %133 = vst.msk [vmem:[#allocation7 + $0x8] sm:$0xff] %vm115, %v131
    $region29: #{tpu_custom_call.1} parent=1 // pred_fallthru
      _
    // Predicated region
    $region30: #{tpu_custom_call.1} parent=1 // pred_check
      _
    $region31: #{tpu_custom_call.1} parent=1 // pred_check_branch
      %135 = sbr.rel (0) target = $region33
    $region32: #{tpu_custom_call.1} parent=1 // pred_region
      %s137 = ssub.s32 256, 256
      %138 = vsyncadd [#allocation4], %s137
      %s139 = sshll.u32 [#allocation7], 4
      %s140 = int_to_ptr.vmem [resolvable:$true] %s139
      %145 = dma.vmem_to_hbm [thread:$0]  %s140, 256, %s3, [#allocation4], 128, 128, 8
    $region33: #{tpu_custom_call.1} parent=1 // pred_fallthru
      _
    // Predicated region
    $region34: #{tpu_custom_call.1} parent=1 // pred_check
      _
    $region35: #{tpu_custom_call.1} parent=1 // pred_check_branch
      %147 = sbr.rel (0) target = $region37
    $region36: #{tpu_custom_call.1} parent=1 // pred_region
      %148 = dma.done [#allocation4], 256
    $region37: #{tpu_custom_call.1} parent=1 // pred_fallthru
      _
    %149 = vsyncpa [#allocation3], 1
    %150 = vsyncpa [#allocation6], 1
    %151 = vsyncpa [#allocation4], 1

</llo_original>
